<compile_context>
chip_gen: v5e
topology: v5e:2x2
jax: 0.10.0
libtpu: 0.0.40
codegen_flags: <defaults>
</compile_context>

<pallas_src>
import jax
import jax.numpy as jnp
from jax.experimental import pallas as pl
from jax.experimental.pallas import tpu as pltpu

DIM = 5            # [alloc_pop0, alloc_pop1, prev_pop0, prev_pop1, prev_pop2]
NUM_POP = 3
POPULATIONS = (50000.0, 75000.0, 100000.0)
LANE = 128
DEFAULT_TILE_N = 2048   # multiple of 128; block VMEM ~= 6 * 2048 * 4 B << 32 MiB


def _round_up(x: int, m: int) -> int:
    return ((x + m - 1) // m) * m


def _covid_kernel(coefs):
    """Kernel body with populations * sign / replications baked in as constants."""
    c0, c1, c2 = coefs

    def kernel(xt_ref, out_ref):
        # xt_ref: (DIM, TILE_N) lane-dense; sublane rows 2..4 are the initial
        # prevalences. Output = 3 lane-dense fused multiply-adds, no XLU work.
        out_ref[...] = (c0 * xt_ref[2:3, :]
                        + c1 * xt_ref[3:4, :]
                        + c2 * xt_ref[4:5, :])

    return kernel


def covid_sim_forward(X, num_tests: int = 10000, replications: int = 1,
                      negate: bool = False, tile_n: int = DEFAULT_TILE_N):
    """JAX/Pallas port of CovidSim.forward (deterministic portion).

    Args:
        X: `(n, dim)` or `(n, 1, dim)` array, dim = 5.
    Returns:
        `(n, 1)` (or `(n, 1, 1)`) array of infection counts.
    """
    del num_tests  # only affects pop_test_frac, which feeds the untranslatable simulator
    assert X.ndim <= 3
    assert X.shape[-1] == DIM
    out_size = X.shape[:-1] + (1,)
    Xf = jnp.asarray(X, jnp.float32).reshape(-1, DIM)
    n = Xf.shape[0]

    # Lane-dense layout: features on sublanes, solutions on lanes.
    xt = Xf.T                                            # (DIM, n)
    tile_n = _round_up(max(LANE, min(int(tile_n), _round_up(n, LANE))), LANE)
    n_pad = _round_up(n, tile_n)
    if n_pad != n:
        xt = jnp.pad(xt, ((0, 0), (0, n_pad - n)))       # zero pad -> harmless lanes

    sign = -1.0 if negate else 1.0
    scale = sign / float(replications)
    coefs = tuple(p * scale for p in POPULATIONS)

    # Lazy constraint flag (device-side); concretized only after the kernel is
    # launched so the host sync overlaps kernel execution.
    violation = jnp.any(Xf[:, 0] + Xf[:, 1] > 1.0)

    grid = (n_pad // tile_n,)
    out_t = pl.pallas_call(
        _covid_kernel(coefs),
        out_shape=jax.ShapeDtypeStruct((1, n_pad), jnp.float32),
        grid=grid,
        in_specs=[pl.BlockSpec((DIM, tile_n), lambda i: (0, i))],
        out_specs=pl.BlockSpec((1, tile_n), lambda i: (0, i)),
        compiler_params=pltpu.CompilerParams(
            dimension_semantics=("parallel",)),
        cost_estimate=pl.CostEstimate(
            flops=5 * n_pad,
            transcendentals=0,
            bytes_accessed=(DIM + 1) * 4 * n_pad),
    )(xt)

    if not isinstance(violation, jax.core.Tracer):
        if bool(violation):
            raise ValueError(
                "Got input allocating more than 100% to first two populations!")
    # TODO(synk): under jit/vmap the ValueError cannot be raised data-dependently;
    # the constraint is silently skipped there (use checkify if needed).

    out = out_t[:, :n].T                                 # (n, 1)
    return out.reshape(out_size)


if __name__ == "__main__":
    key = jax.random.PRNGKey(0)
    k_alloc, k_prev = jax.random.split(key)
    n = 8
    # Allocations to first two populations, each < 0.5 so the sum stays <= 1.
    alloc = jax.random.uniform(k_alloc, (n, 2), jnp.float32) * 0.5
    # Initial prevalences within the problem bounds [0.001, 0.008].
    prev = jax.random.uniform(k_prev, (n, NUM_POP), jnp.float32,
                              minval=0.001, maxval=0.008)
    X = jnp.concatenate([alloc, prev], axis=-1)          # (n, 5)

    pops = jnp.asarray(POPULATIONS, jnp.float32)
    ref = jnp.sum(X[:, 2:] * pops, axis=-1, keepdims=True)

    out = jax.block_until_ready(covid_sim_forward(X, num_tests=10000,
                                                  replications=1, negate=False))
    assert out.shape == (n, 1)
    assert bool(jnp.all(jnp.isfinite(out)))
    assert bool(jnp.allclose(out, ref, rtol=1e-5, atol=1e-2))

    # (n, 1, dim) input convention + negate.
    out3 = jax.block_until_ready(covid_sim_forward(X[:, None, :], negate=True))
    assert out3.shape == (n, 1, 1)
    assert bool(jnp.allclose(out3.reshape(n, 1), -ref, rtol=1e-5, atol=1e-2))

    # Multi-tile grid path (grid > 1) with a small tile.
    n2 = 300
    k2a, k2p = jax.random.split(jax.random.PRNGKey(1))
    alloc2 = jax.random.uniform(k2a, (n2, 2), jnp.float32) * 0.5
    prev2 = jax.random.uniform(k2p, (n2, NUM_POP), jnp.float32,
                               minval=0.001, maxval=0.008)
    X2 = jnp.concatenate([alloc2, prev2], axis=-1)
    out2 = jax.block_until_ready(covid_sim_forward(X2, tile_n=128))
    ref2 = jnp.sum(X2[:, 2:] * pops, axis=-1, keepdims=True)
    assert out2.shape == (n2, 1)
    assert bool(jnp.allclose(out2, ref2, rtol=1e-5, atol=1e-2))

    # Constraint-violation semantics (ValueError, mirrors the torch check).
    X_bad = X.at[0, 0].set(0.8).at[0, 1].set(0.5)
    try:
        jax.block_until_ready(covid_sim_forward(X_bad))
        raise AssertionError("expected ValueError for >100% allocation")
    except ValueError:
        pass

    print("KERNEL_OK")
</pallas_src>

<mosaic_0001>
module attributes {stable_mosaic.version = 11 : i64} {
  func.func @kernel(%arg0: i32, %arg1: memref<5x128xf32, #tpu.memory_space<vmem>>, %arg2: memref<1x128xf32, #tpu.memory_space<vmem>>) attributes {dimension_semantics = [#tpu.dimension_semantics<parallel>], iteration_bounds = array<i64: 1>, scalar_prefetch = 0 : i64, scratch_operands = 0 : i64, tpu.core_type = #tpu.core_type<tc>, window_params = [{transform_indices = @transform_0, window_bounds = array<i64: 5, 128>}, {transform_indices = @transform_1, window_bounds = array<i64: 1, 128>}]} {
    %c2 = arith.constant 2 : index
    %c0 = arith.constant 0 : index
    %0 = vector.load %arg1[%c2, %c0] : memref<5x128xf32, #tpu.memory_space<vmem>>, vector<1x128xf32>
    %cst = arith.constant 5.000000e+04 : f32
    %1 = vector.broadcast %cst : f32 to vector<1x128xf32>
    %2 = arith.mulf %1, %0 : vector<1x128xf32>
    %c3 = arith.constant 3 : index
    %c0_0 = arith.constant 0 : index
    %3 = vector.load %arg1[%c3, %c0_0] : memref<5x128xf32, #tpu.memory_space<vmem>>, vector<1x128xf32>
    %cst_1 = arith.constant 7.500000e+04 : f32
    %4 = vector.broadcast %cst_1 : f32 to vector<1x128xf32>
    %5 = arith.mulf %4, %3 : vector<1x128xf32>
    %6 = arith.addf %2, %5 : vector<1x128xf32>
    %c4 = arith.constant 4 : index
    %c0_2 = arith.constant 0 : index
    %7 = vector.load %arg1[%c4, %c0_2] : memref<5x128xf32, #tpu.memory_space<vmem>>, vector<1x128xf32>
    %cst_3 = arith.constant 1.000000e+05 : f32
    %8 = vector.broadcast %cst_3 : f32 to vector<1x128xf32>
    %9 = arith.mulf %8, %7 : vector<1x128xf32>
    %10 = arith.addf %6, %9 : vector<1x128xf32>
    %c0_4 = arith.constant 0 : index
    %c0_5 = arith.constant 0 : index
    %11 = vector.load %arg2[%c0_4, %c0_5] : memref<1x128xf32, #tpu.memory_space<vmem>>, vector<1x128xf32>
    tpu.vector_store %arg2[%c0_4, %c0_5], %10 {strides = array<i32>} : memref<1x128xf32, #tpu.memory_space<vmem>>, vector<1x128xf32>,
    return
  }
  func.func @transform_0(%arg0: i32) -> (i32, i32) {
    %c0_i32 = arith.constant 0 : i32
    %c0_i32_0 = arith.constant 0 : i32
    return %c0_i32, %arg0 : i32, i32
  }
  func.func @transform_1(%arg0: i32) -> (i32, i32) {
    %c0_i32 = arith.constant 0 : i32
    %c0_i32_0 = arith.constant 0 : i32
    return %c0_i32, %arg0 : i32, i32
  }
}

</mosaic_0001>

<llo_original>
// kernel: tpu_custom_call.1
$region0: #{tpu_custom_call.1}
  #allocation0 [shape = 'u32[]', space=smem, size = 0x4, offset = 0x4, fixed_abs, tag = 'smem constant byte address 0x4 - core index']
  #allocation1 [shape = 'u32[72,128]{1,0:T(1,128)}', space=vmem, size = 0x9000, scoped, tag = 'internal scratch']
  %s0 = inlined_call_operand.hbm [shape: f32[5,128], index: 0, kind: input, shape index: {}]
  %s1 = inlined_call_operand.hbm [shape: f32[1,128], index: 1, kind: output, shape index: {}]
  %s2 = sld [smem:[#allocation0]]
  $region18: #{tpu_custom_call.1} parent=0
    _
  %s4 = ssub.s32 1, %s2
  %s5 = scalar_select 0, %s4, %s2
  $region1: #{tpu_custom_call.1} parent=0
    #allocation2 [shape = 'u8[4096]{0}', space=vmem, size = 0x1000, scoped, tag = 'input window, operand 0, single buffered']
    #allocation3 [shape = 's32[1]{0}', space=sflag, size = 0x4, scoped, tag = 'scoped memory for tpu_custom_call.1']
    #allocation4 [shape = 's32[1]{0}', space=sflag, size = 0x4, scoped, tag = 'scoped memory for tpu_custom_call.1']
    #allocation5 [shape = 'u8[512]{0}', space=vmem, size = 0x400, scoped, tag = 'output window, operand 0, single buffered']
    %6 = vsyncpa [#allocation3], 0
    %7 = vsyncpa [#allocation4], 0
    // Predicated region
    $region2: #{tpu_custom_call.1} parent=1 // pred_check
      _
    $region3: #{tpu_custom_call.1} parent=1 // pred_check_branch
      %9 = sbr.rel (0) target = $region5
    $region4: #{tpu_custom_call.1} parent=1 // pred_region
      %11 = vsyncadd [#allocation3], 0
      %s13 = sshll.u32 %s0, 4
      %s14 = int_to_ptr.hbm [resolvable:$true] %s13
      %s15 = sshll.u32 [#allocation2], 4
      %s16 = int_to_ptr.vmem [resolvable:$true] %s15
      %18 = dma.hbm_to_vmem [thread:$0]  %s14, 128, %s16, [#allocation3]
    $region5: #{tpu_custom_call.1} parent=1 // pred_fallthru
      _
    // Predicated region
    $region6: #{tpu_custom_call.1} parent=1 // pred_check
      _
    $region7: #{tpu_custom_call.1} parent=1 // pred_check_branch
      %20 = sbr.rel (0) target = $region9
    $region8: #{tpu_custom_call.1} parent=1 // pred_region
      %22 = dma.done [#allocation3], 128
    $region9: #{tpu_custom_call.1} parent=1 // pred_fallthru
      _
    %v23 = vld [vmem:[#allocation2 + $0x2] sm:$0x1]
    %v24 = vmul.f32 %v23, 50000.0
    %v25 = vld [vmem:[#allocation2 + $0x3] sm:$0x1]
    %v26 = vmul.f32 %v25, 75000.0
    %v27 = vadd.f32 %v24, %v26
    %v28 = vld [vmem:[#allocation2 + $0x4] sm:$0x1]
    %v29 = vmul.f32 %v28, 100000.0
    %v30 = vadd.f32 %v27, %v29
    %31 = vst [vmem:[#allocation5] sm:$0x1] %v30
    // Predicated region
    $region10: #{tpu_custom_call.1} parent=1 // pred_check
      _
    $region11: #{tpu_custom_call.1} parent=1 // pred_check_branch
      %33 = sbr.rel (0) target = $region13
    $region12: #{tpu_custom_call.1} parent=1 // pred_region
      %35 = vsyncadd [#allocation4], 0
      %s37 = sshll.u32 [#allocation5], 4
      %s38 = int_to_ptr.vmem [resolvable:$true] %s37
      %s39 = sshll.u32 %s1, 4
      %s40 = int_to_ptr.hbm [resolvable:$true] %s39
      %42 = dma.vmem_to_hbm [thread:$0]  %s38, 16, %s40, [#allocation4]
    $region13: #{tpu_custom_call.1} parent=1 // pred_fallthru
      _
    // Predicated region
    $region14: #{tpu_custom_call.1} parent=1 // pred_check
      _
    $region15: #{tpu_custom_call.1} parent=1 // pred_check_branch
      %44 = sbr.rel (0) target = $region17
    $region16: #{tpu_custom_call.1} parent=1 // pred_region
      %46 = dma.done [#allocation4], 16
    $region17: #{tpu_custom_call.1} parent=1 // pred_fallthru
      _
    %47 = vsyncpa [#allocation3], 1
    %48 = vsyncpa [#allocation4], 1

</llo_original>
